<compile_context>
chip_gen: v5e
topology: v5e:2x2
jax: 0.10.0
libtpu: 0.0.40
codegen_flags: <defaults>
</compile_context>

<pallas_src>
import functools

import jax
import jax.numpy as jnp
from jax import lax
from jax.experimental import pallas as pl
from jax.experimental.pallas import tpu as pltpu


def _round_up(a, b):
    return ((a + b - 1) // b) * b


def _vmem_limit_bytes():
    """Per-generation scoped-VMEM limit, leaving headroom for Mosaic scratch."""
    cap = 64 * 1024 * 1024  # conservative default (v7x per-TensorCore VMEM)
    try:
        info = pltpu.get_tpu_info()
        cap = int(getattr(info, "vmem_capacity_bytes", cap))
    except Exception:
        pass
    # ~48 MiB on v7x (64 MiB parts), ~112 MiB on v5e/v6e (128 MiB parts).
    return max(32 * 1024 * 1024, min(cap - 16 * 1024 * 1024, 112 * 1024 * 1024))


def _pad_and_tiles(n, adj_stream_bytes, vmem_limit):
    """Zero-pad N and pick (TILE_M, TILE_K) so the double-buffered adj stream
    fits ~half the VMEM limit (the rest covers xs/dinv/W/acc/out blocks)."""
    budget = vmem_limit // 2
    if n < 128:
        n_pad = _round_up(max(n, 8), 8)
        tile_k = n_pad                       # full last dim: always a legal block
    else:
        n_pad = _round_up(n, 128)
        tile_k = 128
        for c in (2048, 1024, 512, 256, 128):  # lane-aligned column tiles
            if c <= n_pad and n_pad % c == 0:
                tile_k = c
                break
    m_cands = [c for c in (512, 256, 128, 64, 32, 16, 8) if c <= n_pad]
    if n_pad <= 512 and n_pad not in m_cands:
        m_cands.insert(0, n_pad)
    tile_m = 8
    for c in m_cands:
        if n_pad % c == 0 and 2 * c * tile_k * adj_stream_bytes <= budget:
            tile_m = c
            break
    return n_pad, tile_m, tile_k


# ------------------------------ prep kernel ----------------------------------
def prep_kernel(adj_ref, x_ref, *rest, repack):
    # grid = (M_tiles, K_tiles), K last.  Accumulates row degrees over K; at the
    # last K step emits dinv = (deg+1)^-1/2 (EUP rsqrt) and xs = dinv ⊙ x.
    # Optionally repacks the adj block to the main pass' compute dtype (bf16).
    if repack:
        adj_out_ref, dinv_ref, xs_ref, rowsum_ref = rest
    else:
        dinv_ref, xs_ref, rowsum_ref = rest
    k = pl.program_id(1)

    @pl.when(k == 0)
    def _():
        rowsum_ref[...] = jnp.zeros_like(rowsum_ref)

    adj_blk = adj_ref[...]
    rowsum_ref[...] += jnp.sum(adj_blk.astype(jnp.float32), axis=-1, keepdims=True)
    if repack:
        adj_out_ref[...] = adj_blk.astype(adj_out_ref.dtype)

    @pl.when(k == pl.num_programs(1) - 1)
    def _():
        dinv = lax.rsqrt(rowsum_ref[...] + 1.0)          # self loop: deg + 1
        dinv_ref[...] = dinv
        xs_ref[...] = (dinv * x_ref[...]).astype(xs_ref.dtype)


# ------------------------------ main kernel ----------------------------------
def gcn_main_kernel(adj_ref, xs_k_ref, dinv_ref, xs_m_ref, w_ref, b_ref,
                    out_ref, acc_ref):
    k = pl.program_id(1)

    @pl.when(k == 0)
    def _():
        acc_ref[...] = jnp.zeros_like(acc_ref)

    # Message passing on the MXU with f32 accumulation; adj arrives already in
    # the compute dtype (e.g. bf16), so the dominant HBM stream is not recast.
    acc_ref[...] += jnp.dot(adj_ref[...], xs_k_ref[...],
                            preferred_element_type=jnp.float32)

    @pl.when(k == pl.num_programs(1) - 1)
    def _():
        dinv = dinv_ref[...]                              # (TILE_M, 1)
        # dinv ⊙ (adj@(dinv⊙x) + dinv⊙x) == A_norm @ x for A' = adj + I.
        h = dinv * (acc_ref[...] + xs_m_ref[...].astype(jnp.float32))
        # Linear layer.  F_in < F_out here so contracting adj against the
        # narrow feature dim first is the cheaper order.
        # TODO(synk): if a config has F_out < F_in, fold W.T before the adj
        # matmul instead (z = xs @ W.T, then adj @ z).
        y = jnp.dot(h, w_ref[...], preferred_element_type=jnp.float32) + b_ref[...]
        # F.normalize(dim=1): y * rsqrt(max(||y||^2, 1e-24)) (EUP rsqrt).
        # Zero-padded F_out lanes do not change the row norm.
        sumsq = jnp.sum(y * y, axis=-1, keepdims=True)
        out_ref[...] = (y * lax.rsqrt(jnp.maximum(sumsq, 1e-24))).astype(out_ref.dtype)


# -------------------------------- wrapper -------------------------------------
def gcn_forward(x, adj, weight, bias, *, adj_compute_dtype=None,
                tile_m=None, tile_k=None):
    """x: (N, F_in), adj: (N, N), weight: (F_out, F_in), bias: (F_out,).

    adj_compute_dtype: dtype the main pass streams adj / xs in.  Defaults to
    adj.dtype (f32 path).  Pass jnp.bfloat16 to halve the main pass' dominant
    HBM stream (adj is repacked once by the prep pass, or consumed directly if
    the caller already supplies bf16 adj)."""
    x = jnp.asarray(x).astype(jnp.float32)
    adj = jnp.asarray(adj)
    if adj.dtype != jnp.bfloat16:
        adj = adj.astype(jnp.float32)
    n, f_in = x.shape
    assert adj.shape == (n, n)
    f_out = weight.shape[0]

    compute_dtype = jax.dtypes.canonicalize_dtype(
        adj_compute_dtype if adj_compute_dtype is not None else adj.dtype)
    repack = compute_dtype != adj.dtype

    vmem_limit = _vmem_limit_bytes()
    # Prep is the heaviest per-block consumer: input adj (+ repacked copy).
    stream_bytes = adj.dtype.itemsize + (compute_dtype.itemsize if repack else 0)
    n_pad, auto_tm, auto_tk = _pad_and_tiles(n, stream_bytes, vmem_limit)
    tile_m = tile_m or auto_tm
    tile_k = tile_k or auto_tk
    assert n_pad % tile_m == 0 and n_pad % tile_k == 0

    # Zero-pad node axis (padded rows: deg = 0 + self loop = 1, zero features ->
    # real rows unaffected) and pad F_out to a lane-dense multiple of 128.
    if n_pad != n:
        adj = jnp.pad(adj, ((0, n_pad - n), (0, n_pad - n)))
        x = jnp.pad(x, ((0, n_pad - n), (0, 0)))
    f_out_pad = _round_up(f_out, 128)
    w_t = jnp.pad(weight.T.astype(jnp.float32), ((0, 0), (0, f_out_pad - f_out)))
    b2 = jnp.pad(bias.astype(jnp.float32), (0, f_out_pad - f_out)).reshape(1, f_out_pad)

    grid = (n_pad // tile_m, n_pad // tile_k)
    cbytes = compute_dtype.itemsize
    abytes = adj.dtype.itemsize

    # ---------------- pass 1: degrees (+ xs hoist, optional adj repack) -------
    prep_out_shapes = []
    prep_out_specs = []
    if repack:
        prep_out_shapes.append(jax.ShapeDtypeStruct((n_pad, n_pad), compute_dtype))
        prep_out_specs.append(pl.BlockSpec((tile_m, tile_k), lambda m, k: (m, k)))
    prep_out_shapes += [
        jax.ShapeDtypeStruct((n_pad, 1), jnp.float32),       # dinv
        jax.ShapeDtypeStruct((n_pad, f_in), compute_dtype),  # xs = dinv ⊙ x
    ]
    prep_out_specs += [
        pl.BlockSpec((tile_m, 1), lambda m, k: (m, 0)),
        pl.BlockSpec((tile_m, f_in), lambda m, k: (m, 0)),
    ]

    prep_outs = pl.pallas_call(
        functools.partial(prep_kernel, repack=repack),
        out_shape=tuple(prep_out_shapes),
        grid=grid,
        in_specs=[
            pl.BlockSpec((tile_m, tile_k), lambda m, k: (m, k)),   # adj (input dtype)
            pl.BlockSpec((tile_m, f_in), lambda m, k: (m, 0)),     # x row block
        ],
        out_specs=tuple(prep_out_specs),
        scratch_shapes=[pltpu.VMEM((tile_m, 1), jnp.float32)],
        compiler_params=pltpu.CompilerParams(
            dimension_semantics=("parallel", "arbitrary"),
            vmem_limit_bytes=vmem_limit,
        ),
        cost_estimate=pl.CostEstimate(
            flops=n_pad * n_pad,
            transcendentals=n_pad,
            bytes_accessed=abytes * n_pad * n_pad
            + (cbytes * n_pad * n_pad if repack else 0)
            + 4 * n_pad * (f_in + 1) + cbytes * n_pad * f_in),
    )(adj, x)

    if repack:
        adj_c, dinv, xs = prep_outs
    else:
        dinv, xs = prep_outs
        adj_c = adj

    # ---------------- pass 2: A_norm @ x, linear, normalize -------------------
    flops = 2 * n_pad * n_pad * f_in + 2 * n_pad * f_in * f_out_pad
    bytes_accessed = (cbytes * n_pad * n_pad + 2 * cbytes * n_pad * f_in
                      + 4 * (n_pad + f_in * f_out_pad + f_out_pad
                             + n_pad * f_out_pad))

    out_pad = pl.pallas_call(
        gcn_main_kernel,
        out_shape=jax.ShapeDtypeStruct((n_pad, f_out_pad), jnp.float32),
        grid=grid,
        in_specs=[
            pl.BlockSpec((tile_m, tile_k), lambda m, k: (m, k)),   # adj (compute dtype)
            pl.BlockSpec((tile_k, f_in), lambda m, k: (k, 0)),     # xs K block (MXU rhs)
            pl.BlockSpec((tile_m, 1), lambda m, k: (m, 0)),        # dinv row block
            pl.BlockSpec((tile_m, f_in), lambda m, k: (m, 0)),     # xs row block (self loop)
            pl.BlockSpec((f_in, f_out_pad), lambda m, k: (0, 0)),  # W.T (padded), resident
            pl.BlockSpec((1, f_out_pad), lambda m, k: (0, 0)),     # bias (padded), resident
        ],
        out_specs=pl.BlockSpec((tile_m, f_out_pad), lambda m, k: (m, 0)),
        scratch_shapes=[pltpu.VMEM((tile_m, f_in), jnp.float32)],
        compiler_params=pltpu.CompilerParams(
            dimension_semantics=("parallel", "arbitrary"),
            vmem_limit_bytes=vmem_limit,
        ),
        cost_estimate=pl.CostEstimate(
            flops=flops, transcendentals=2 * n_pad, bytes_accessed=bytes_accessed),
    )(adj_c, xs, dinv, xs, w_t, b2)

    return out_pad[:n, :f_out]


def gcn_reference(x, adj, weight, bias):
    n = adj.shape[0]
    a = adj + jnp.eye(n, dtype=adj.dtype)
    deg = jnp.sum(a, axis=-1)
    dinv = deg ** -0.5
    a = jnp.diag(dinv) @ a @ jnp.diag(dinv)
    y = (a @ x) @ weight.T + bias
    norm = jnp.linalg.norm(y, axis=1, keepdims=True)
    return y / jnp.maximum(norm, 1e-12)


if __name__ == "__main__":
    N = 64            # nodes
    F_IN = 8          # in_features
    F_OUT = 32        # out_features

    key = jax.random.PRNGKey(0)
    k_x, k_adj, k_w, k_b = jax.random.split(key, 4)

    # inputs: non-negative adjacency so degrees are strictly positive
    x = jax.random.normal(k_x, (N, F_IN), dtype=jnp.float32)
    adj = jax.random.uniform(k_adj, (N, N), dtype=jnp.float32)

    # parameters: xavier_uniform_(weight, gain=calculate_gain('relu')=sqrt(2))
    gain = jnp.sqrt(2.0)
    bound_w = gain * jnp.sqrt(6.0 / (F_IN + F_OUT))
    weight = jax.random.uniform(k_w, (F_OUT, F_IN), dtype=jnp.float32,
                                minval=-bound_w, maxval=bound_w)
    # nn.Linear default bias init: U(-1/sqrt(fan_in), 1/sqrt(fan_in))
    bound_b = 1.0 / jnp.sqrt(F_IN)
    bias = jax.random.uniform(k_b, (F_OUT,), dtype=jnp.float32,
                              minval=-bound_b, maxval=bound_b)

    ref = gcn_reference(x, adj, weight, bias)

    # f32 path.
    out = jax.block_until_ready(gcn_forward(x, adj, weight, bias))
    assert out.shape == (N, F_OUT)
    assert jnp.allclose(out, ref, rtol=1e-4, atol=1e-5)

    # bf16-adjacency path (adj repacked to bf16 by the prep pass; main pass
    # streams 2-byte adj from HBM), looser tolerance.
    out_bf16 = jax.block_until_ready(
        gcn_forward(x, adj, weight, bias, adj_compute_dtype=jnp.bfloat16))
    assert jnp.allclose(out_bf16, ref, rtol=5e-2, atol=5e-2)

    # Non-multiple-of-8 N exercises the zero-padding + lane-dense F_out path.
    N2 = 37
    x2 = jax.random.normal(k_x, (N2, F_IN), dtype=jnp.float32)
    adj2 = jax.random.uniform(k_adj, (N2, N2), dtype=jnp.float32)
    ref2 = gcn_reference(x2, adj2, weight, bias)
    out2 = jax.block_until_ready(gcn_forward(x2, adj2, weight, bias))
    assert out2.shape == (N2, F_OUT)
    assert jnp.allclose(out2, ref2, rtol=1e-4, atol=1e-5)

    print("KERNEL_OK")
</pallas_src>

<mosaic_0001>
module attributes {stable_mosaic.version = 11 : i64} {
  func.func @prep_kernel(%arg0: i32, %arg1: i32, %arg2: memref<64x64xf32, #tpu.memory_space<vmem>>, %arg3: memref<64x8xf32, #tpu.memory_space<vmem>>, %arg4: memref<64x1xf32, #tpu.memory_space<vmem>>, %arg5: memref<64x8xf32, #tpu.memory_space<vmem>>, %arg6: memref<64x1xf32, #tpu.memory_space<vmem>>) attributes {dimension_semantics = [#tpu.dimension_semantics<parallel>, #tpu.dimension_semantics<arbitrary>], iteration_bounds = array<i64: 1, 1>, scalar_prefetch = 0 : i64, scratch_operands = 1 : i64, tpu.core_type = #tpu.core_type<tc>, window_params = [{transform_indices = @transform_0, window_bounds = array<i64: 64, 64>}, {transform_indices = @transform_1, window_bounds = array<i64: 64, 8>}, {transform_indices = @transform_2, window_bounds = array<i64: 64, 1>}, {transform_indices = @transform_3, window_bounds = array<i64: 64, 8>}]} {
    %c0_i32 = arith.constant 0 : i32
    %0 = arith.cmpi eq, %arg1, %c0_i32 : i32
    %1 = arith.extui %0 : i1 to i32
    %c0_i32_0 = arith.constant 0 : i32
    %2 = arith.cmpi ne, %1, %c0_i32_0 : i32
    scf.if %2 {
      %cst_8 = arith.constant 0.000000e+00 : f32
      %12 = vector.broadcast %cst_8 : f32 to vector<64x1xf32>
      %c0_9 = arith.constant 0 : index
      %c0_10 = arith.constant 0 : index
      %13 = vector.load %arg6[%c0_9, %c0_10] : memref<64x1xf32, #tpu.memory_space<vmem>>, vector<64x1xf32>
      tpu.vector_store %arg6[%c0_9, %c0_10], %12 {strides = array<i32>} : memref<64x1xf32, #tpu.memory_space<vmem>>, vector<64x1xf32>,
    } else {
    }
    %c0 = arith.constant 0 : index
    %c0_1 = arith.constant 0 : index
    %3 = vector.load %arg2[%c0, %c0_1] : memref<64x64xf32, #tpu.memory_space<vmem>>, vector<64x64xf32>
    %c0_2 = arith.constant 0 : index
    %c0_3 = arith.constant 0 : index
    %4 = vector.load %arg6[%c0_2, %c0_3] : memref<64x1xf32, #tpu.memory_space<vmem>>, vector<64x1xf32>
    %cst = arith.constant dense<0.000000e+00> : vector<64xf32>
    %5 = vector.multi_reduction <add>, %3, %cst [1] : vector<64x64xf32> to vector<64xf32>
    %6 = vector.shape_cast %5 : vector<64xf32> to vector<64x1xf32>
    %7 = arith.addf %4, %6 : vector<64x1xf32>
    %c0_4 = arith.constant 0 : index
    %c0_5 = arith.constant 0 : index
    %8 = vector.load %arg6[%c0_4, %c0_5] : memref<64x1xf32, #tpu.memory_space<vmem>>, vector<64x1xf32>
    tpu.vector_store %arg6[%c0_4, %c0_5], %7 {strides = array<i32>} : memref<64x1xf32, #tpu.memory_space<vmem>>, vector<64x1xf32>,
    %c0_i32_6 = arith.constant 0 : i32
    %9 = arith.cmpi eq, %arg1, %c0_i32_6 : i32
    %10 = arith.extui %9 : i1 to i32
    %c0_i32_7 = arith.constant 0 : i32
    %11 = arith.cmpi ne, %10, %c0_i32_7 : i32
    scf.if %11 {
      %c0_8 = arith.constant 0 : index
      %c0_9 = arith.constant 0 : index
      %12 = vector.load %arg6[%c0_8, %c0_9] : memref<64x1xf32, #tpu.memory_space<vmem>>, vector<64x1xf32>
      %cst_10 = arith.constant 1.000000e+00 : f32
      %13 = vector.broadcast %cst_10 : f32 to vector<64x1xf32>
      %14 = arith.addf %12, %13 : vector<64x1xf32>
      %15 = math.rsqrt %14 : vector<64x1xf32>
      %c0_11 = arith.constant 0 : index
      %c0_12 = arith.constant 0 : index
      %16 = vector.load %arg4[%c0_11, %c0_12] : memref<64x1xf32, #tpu.memory_space<vmem>>, vector<64x1xf32>
      tpu.vector_store %arg4[%c0_11, %c0_12], %15 {strides = array<i32>} : memref<64x1xf32, #tpu.memory_space<vmem>>, vector<64x1xf32>,
      %c0_13 = arith.constant 0 : index
      %c0_14 = arith.constant 0 : index
      %17 = vector.load %arg3[%c0_13, %c0_14] : memref<64x8xf32, #tpu.memory_space<vmem>>, vector<64x8xf32>
      %18 = vector.broadcast %15 : vector<64x1xf32> to vector<64x8xf32>
      %19 = arith.mulf %18, %17 : vector<64x8xf32>
      %c0_15 = arith.constant 0 : index
      %c0_16 = arith.constant 0 : index
      %20 = vector.load %arg5[%c0_15, %c0_16] : memref<64x8xf32, #tpu.memory_space<vmem>>, vector<64x8xf32>
      tpu.vector_store %arg5[%c0_15, %c0_16], %19 {strides = array<i32>} : memref<64x8xf32, #tpu.memory_space<vmem>>, vector<64x8xf32>,
    } else {
    }
    return
  }
  func.func @transform_0(%arg0: i32, %arg1: i32) -> (i32, i32) {
    %c0_i32 = arith.constant 0 : i32
    return %arg0, %arg1 : i32, i32
  }
  func.func @transform_1(%arg0: i32, %arg1: i32) -> (i32, i32) {
    %c0_i32 = arith.constant 0 : i32
    %c0_i32_0 = arith.constant 0 : i32
    return %arg0, %c0_i32 : i32, i32
  }
  func.func @transform_2(%arg0: i32, %arg1: i32) -> (i32, i32) {
    %c0_i32 = arith.constant 0 : i32
    %c0_i32_0 = arith.constant 0 : i32
    return %arg0, %c0_i32 : i32, i32
  }
  func.func @transform_3(%arg0: i32, %arg1: i32) -> (i32, i32) {
    %c0_i32 = arith.constant 0 : i32
    %c0_i32_0 = arith.constant 0 : i32
    return %arg0, %c0_i32 : i32, i32
  }
}

</mosaic_0001>

<llo_original>
// kernel: tpu_custom_call.1
$region0: #{tpu_custom_call.1}
  #allocation0 [shape = 'u32[]', space=smem, size = 0x4, offset = 0x4, fixed_abs, tag = 'smem constant byte address 0x4 - core index']
  #allocation1 [shape = 'u32[72,128]{1,0:T(1,128)}', space=vmem, size = 0x9000, scoped, tag = 'internal scratch']
  #allocation2 [shape = 'f32[64,1]{1,0:T(8,128)}', space=vmem, size = 0x8000, scoped, tag = 'scratch operand']
  %s0 = inlined_call_operand.vmem [shape: f32[64,64], index: 0, kind: input, shape index: {}]
  %s1 = inlined_call_operand.vmem [shape: f32[64,8], index: 1, kind: input, shape index: {}]
  %s2 = inlined_call_operand.vmem [shape: f32[64,1], index: 2, kind: output, shape index: {0}]
  %s3 = inlined_call_operand.vmem [shape: f32[64,8], index: 3, kind: output, shape index: {1}]
  %4 = xla_tuple %s2, %s3
  %s5 = sld [smem:[#allocation0]]
  $region34: #{tpu_custom_call.1} parent=0
    _
  %s7 = ssub.s32 1, %s5
  %s8 = scalar_select 0, %s7, %s5
  // Predicated region
  $region2: #{tpu_custom_call.1} parent=0 // pred_check
    _
  $region3: #{tpu_custom_call.1} parent=0 // pred_check_branch
    %10 = sbr.rel (0) target = $region5
  $region4: #{tpu_custom_call.1} parent=0 // pred_region
    _
  $region5: #{tpu_custom_call.1} parent=0 // pred_fallthru
    _
  // Predicated region
  $region6: #{tpu_custom_call.1} parent=0 // pred_check
    _
  $region7: #{tpu_custom_call.1} parent=0 // pred_check_branch
    %12 = sbr.rel (0) target = $region9
  $region8: #{tpu_custom_call.1} parent=0 // pred_region
    _
  $region9: #{tpu_custom_call.1} parent=0 // pred_fallthru
    _
  %p13 = scmp.eq.s32.totalorder 0, 0
  // Predicated region
  $region10: #{tpu_custom_call.1} parent=0 // pred_check
    %p14 = pneg %p13
  $region11: #{tpu_custom_call.1} parent=0 // pred_check_branch
    %16 = sbr.rel (%p14) target = $region13
  $region12: #{tpu_custom_call.1} parent=0 // pred_region
    %vm17 = vcmask 7168
    %18 = vst.msk [vmem:[#allocation2] sm:$0xff] %vm17, 0.0
    %19 = vst.msk [vmem:[#allocation2 + $0x8] sm:$0xff] %vm17, 0.0
    %20 = vst.msk [vmem:[#allocation2 + $0x10] sm:$0xff] %vm17, 0.0
    %21 = vst.msk [vmem:[#allocation2 + $0x18] sm:$0xff] %vm17, 0.0
    %22 = vst.msk [vmem:[#allocation2 + $0x20] sm:$0xff] %vm17, 0.0
    %23 = vst.msk [vmem:[#allocation2 + $0x28] sm:$0xff] %vm17, 0.0
    %24 = vst.msk [vmem:[#allocation2 + $0x30] sm:$0xff] %vm17, 0.0
    %25 = vst.msk [vmem:[#allocation2 + $0x38] sm:$0xff] %vm17, 0.0
  $region13: #{tpu_custom_call.1} parent=0 // pred_fallthru
    _
  %v26 = vld [vmem:[%s0] sm:$0xff]
  %v27 = vld [vmem:[%s0 + $0x8] sm:$0xff]
  %v28 = vld [vmem:[%s0 + $0x10] sm:$0xff]
  %v29 = vld [vmem:[%s0 + $0x18] sm:$0xff]
  %v30 = vld [vmem:[%s0 + $0x20] sm:$0xff]
  %v31 = vld [vmem:[%s0 + $0x28] sm:$0xff]
  %v32 = vld [vmem:[%s0 + $0x30] sm:$0xff]
  %v33 = vld [vmem:[%s0 + $0x38] sm:$0xff]
  %v34 = vld [vmem:[#allocation2] sm:$0xff]
  %v35 = vld [vmem:[#allocation2 + $0x8] sm:$0xff]
  %v36 = vld [vmem:[#allocation2 + $0x10] sm:$0xff]
  %v37 = vld [vmem:[#allocation2 + $0x18] sm:$0xff]
  %v38 = vld [vmem:[#allocation2 + $0x20] sm:$0xff]
  %v39 = vld [vmem:[#allocation2 + $0x28] sm:$0xff]
  %v40 = vld [vmem:[#allocation2 + $0x30] sm:$0xff]
  %v41 = vld [vmem:[#allocation2 + $0x38] sm:$0xff]
  %vm42 = vcmask 523264
  %v43 = vsel %vm42, %v26, 0.0
  %44 = vadd.xlane.f32.xlu0 %v43
  %v45 = vpop.xlane.xlu0 %44
  %v46 = vsel %vm42, %v27, 0.0
  %47 = vadd.xlane.f32.xlu0 %v46
  %v48 = vpop.xlane.xlu0 %47
  %v49 = vsel %vm42, %v28, 0.0
  %50 = vadd.xlane.f32.xlu0 %v49
  %v51 = vpop.xlane.xlu0 %50
  %v52 = vsel %vm42, %v29, 0.0
  %53 = vadd.xlane.f32.xlu0 %v52
  %v54 = vpop.xlane.xlu0 %53
  %v55 = vsel %vm42, %v30, 0.0
  %56 = vadd.xlane.f32.xlu0 %v55
  %v57 = vpop.xlane.xlu0 %56
  %v58 = vsel %vm42, %v31, 0.0
  %59 = vadd.xlane.f32.xlu0 %v58
  %v60 = vpop.xlane.xlu0 %59
  %v61 = vsel %vm42, %v32, 0.0
  %62 = vadd.xlane.f32.xlu0 %v61
  %v63 = vpop.xlane.xlu0 %62
  %v64 = vsel %vm42, %v33, 0.0
  %65 = vadd.xlane.f32.xlu0 %v64
  %v66 = vpop.xlane.xlu0 %65
  %v67 = vadd.f32 %v34, %v45
  %v68 = vadd.f32 %v35, %v48
  %v69 = vadd.f32 %v36, %v51
  %v70 = vadd.f32 %v37, %v54
  %v71 = vadd.f32 %v38, %v57
  %v72 = vadd.f32 %v39, %v60
  %v73 = vadd.f32 %v40, %v63
  %v74 = vadd.f32 %v41, %v66
  %vm75 = vcmask 7168
  %76 = vst.msk [vmem:[#allocation2] sm:$0xff] %vm75, %v67
  %77 = vst.msk [vmem:[#allocation2 + $0x8] sm:$0xff] %vm75, %v68
  %78 = vst.msk [vmem:[#allocation2 + $0x10] sm:$0xff] %vm75, %v69
  %79 = vst.msk [vmem:[#allocation2 + $0x18] sm:$0xff] %vm75, %v70
  %80 = vst.msk [vmem:[#allocation2 + $0x20] sm:$0xff] %vm75, %v71
  %81 = vst.msk [vmem:[#allocation2 + $0x28] sm:$0xff] %vm75, %v72
  %82 = vst.msk [vmem:[#allocation2 + $0x30] sm:$0xff] %vm75, %v73
  %83 = vst.msk [vmem:[#allocation2 + $0x38] sm:$0xff] %vm75, %v74
  // Predicated region
  $region14: #{tpu_custom_call.1} parent=0 // pred_check
    %p84 = pneg %p13
  $region15: #{tpu_custom_call.1} parent=0 // pred_check_branch
    %86 = sbr.rel (%p84) target = $region17
  $region16: #{tpu_custom_call.1} parent=0 // pred_region
    %v87 = vld [vmem:[#allocation2] sm:$0xff]
    %v88 = vld [vmem:[#allocation2 + $0x8] sm:$0xff]
    %v89 = vld [vmem:[#allocation2 + $0x10] sm:$0xff]
    %v90 = vld [vmem:[#allocation2 + $0x18] sm:$0xff]
    %v91 = vld [vmem:[#allocation2 + $0x20] sm:$0xff]
    %v92 = vld [vmem:[#allocation2 + $0x28] sm:$0xff]
    %v93 = vld [vmem:[#allocation2 + $0x30] sm:$0xff]
    %v94 = vld [vmem:[#allocation2 + $0x38] sm:$0xff]
    %v95 = vadd.f32 %v87, 1.0
    %v96 = vadd.f32 %v88, 1.0
    %v97 = vadd.f32 %v89, 1.0
    %v98 = vadd.f32 %v90, 1.0
    %v99 = vadd.f32 %v91, 1.0
    %v100 = vadd.f32 %v92, 1.0
    %v101 = vadd.f32 %v93, 1.0
    %v102 = vadd.f32 %v94, 1.0
    %v103 = vrsqrt.pop %v95
    %v104 = vmul.f32 %v103, %v95
    %v105 = vmul.f32 %v104, %v103
    %v106 = vmul.f32 0.5, %v105
    %v107 = vsub.f32 1.5, %v106
    %v108 = vmul.f32 %v103, %v107
    %vm109 = vweird.f32 %v95
    %vm110 = vweird.f32 %v103
    %vm111 = vmor %vm109, %vm110
    %v112 = vsel %vm111, %v103, %v108
    %v113 = vrsqrt.pop %v96
    %v114 = vmul.f32 %v113, %v96
    %v115 = vmul.f32 %v114, %v113
    %v116 = vmul.f32 0.5, %v115
    %v117 = vsub.f32 1.5, %v116
    %v118 = vmul.f32 %v113, %v117
    %vm119 = vweird.f32 %v96
    %vm120 = vweird.f32 %v113
    %vm121 = vmor %vm119, %vm120
    %v122 = vsel %vm121, %v113, %v118
    %v123 = vrsqrt.pop %v97
    %v124 = vmul.f32 %v123, %v97
    %v125 = vmul.f32 %v124, %v123
    %v126 = vmul.f32 0.5, %v125
    %v127 = vsub.f32 1.5, %v126
    %v128 = vmul.f32 %v123, %v127
    %vm129 = vweird.f32 %v97
    %vm130 = vweird.f32 %v123
    %vm131 = vmor %vm129, %vm130
    %v132 = vsel %vm131, %v123, %v128
    %v133 = vrsqrt.pop %v98
    %v134 = vmul.f32 %v133, %v98
    %v135 = vmul.f32 %v134, %v133
    %v136 = vmul.f32 0.5, %v135
    %v137 = vsub.f32 1.5, %v136
    %v138 = vmul.f32 %v133, %v137
    %vm139 = vweird.f32 %v98
    %vm140 = vweird.f32 %v133
    %vm141 = vmor %vm139, %vm140
    %v142 = vsel %vm141, %v133, %v138
    %v143 = vrsqrt.pop %v99
    %v144 = vmul.f32 %v143, %v99
    %v145 = vmul.f32 %v144, %v143
    %v146 = vmul.f32 0.5, %v145
    %v147 = vsub.f32 1.5, %v146
    %v148 = vmul.f32 %v143, %v147
    %vm149 = vweird.f32 %v99
    %vm150 = vweird.f32 %v143
    %vm151 = vmor %vm149, %vm150
    %v152 = vsel %vm151, %v143, %v148
    %v153 = vrsqrt.pop %v100
    %v154 = vmul.f32 %v153, %v100
    %v155 = vmul.f32 %v154, %v153
    %v156 = vmul.f32 0.5, %v155
    %v157 = vsub.f32 1.5, %v156
    %v158 = vmul.f32 %v153, %v157
    %vm159 = vweird.f32 %v100
    %vm160 = vweird.f32 %v153
    %vm161 = vmor %vm159, %vm160
    %v162 = vsel %vm161, %v153, %v158
    %v163 = vrsqrt.pop %v101
    %v164 = vmul.f32 %v163, %v101
    %v165 = vmul.f32 %v164, %v163
    %v166 = vmul.f32 0.5, %v165
    %v167 = vsub.f32 1.5, %v166
    %v168 = vmul.f32 %v163, %v167
    %vm169 = vweird.f32 %v101
    %vm170 = vweird.f32 %v163
    %vm171 = vmor %vm169, %vm170
    %v172 = vsel %vm171, %v163, %v168
    %v173 = vrsqrt.pop %v102
    %v174 = vmul.f32 %v173, %v102
    %v175 = vmul.f32 %v174, %v173
    %v176 = vmul.f32 0.5, %v175
    %v177 = vsub.f32 1.5, %v176
    %v178 = vmul.f32 %v173, %v177
    %vm179 = vweird.f32 %v102
    %vm180 = vweird.f32 %v173
    %vm181 = vmor %vm179, %vm180
    %v182 = vsel %vm181, %v173, %v178
    %183 = vst.msk [vmem:[%s2] sm:$0xff] %vm75, %v112
    %184 = vst.msk [vmem:[%s2 + $0x8] sm:$0xff] %vm75, %v122
    %185 = vst.msk [vmem:[%s2 + $0x10] sm:$0xff] %vm75, %v132
    %186 = vst.msk [vmem:[%s2 + $0x18] sm:$0xff] %vm75, %v142
    %187 = vst.msk [vmem:[%s2 + $0x20] sm:$0xff] %vm75, %v152
    %188 = vst.msk [vmem:[%s2 + $0x28] sm:$0xff] %vm75, %v162
    %189 = vst.msk [vmem:[%s2 + $0x30] sm:$0xff] %vm75, %v172
    %190 = vst.msk [vmem:[%s2 + $0x38] sm:$0xff] %vm75, %v182
    %v191 = vld [vmem:[%s1] sm:$0xff]
    %v192 = vld [vmem:[%s1 + $0x8] sm:$0xff]
    %v193 = vld [vmem:[%s1 + $0x10] sm:$0xff]
    %v194 = vld [vmem:[%s1 + $0x18] sm:$0xff]
    %v195 = vld [vmem:[%s1 + $0x20] sm:$0xff]
    %v196 = vld [vmem:[%s1 + $0x28] sm:$0xff]
    %v197 = vld [vmem:[%s1 + $0x30] sm:$0xff]
    %v198 = vld [vmem:[%s1 + $0x38] sm:$0xff]
    %200 = vset.pattern.permute.xlu0 0
    %201 = vperm.xlu0 %200, %v112
    %v202 = vpop.permute.xlu0 %201
    %205 = vset.pattern.permute.xlu0 0
    %206 = vperm.xlu0 %205, %v122
    %v207 = vpop.permute.xlu0 %206
    %210 = vset.pattern.permute.xlu0 0
    %211 = vperm.xlu0 %210, %v132
    %v212 = vpop.permute.xlu0 %211
    %215 = vset.pattern.permute.xlu0 0
    %216 = vperm.xlu0 %215, %v142
    %v217 = vpop.permute.xlu0 %216
    %220 = vset.pattern.permute.xlu0 0
    %221 = vperm.xlu0 %220, %v152
    %v222 = vpop.permute.xlu0 %221
    %225 = vset.pattern.permute.xlu0 0
    %226 = vperm.xlu0 %225, %v162
    %v227 = vpop.permute.xlu0 %226
    %230 = vset.pattern.permute.xlu0 0
    %231 = vperm.xlu0 %230, %v172
    %v232 = vpop.permute.xlu0 %231
    %235 = vset.pattern.permute.xlu0 0
    %236 = vperm.xlu0 %235, %v182
    %v237 = vpop.permute.xlu0 %236
    %v239 = vmul.f32 %v202, %v191
    %v240 = vmul.f32 %v207, %v192
    %v241 = vmul.f32 %v212, %v193
    %v242 = vmul.f32 %v217, %v194
    %v243 = vmul.f32 %v222, %v195
    %v244 = vmul.f32 %v227, %v196
    %v245 = vmul.f32 %v232, %v197
    %v246 = vmul.f32 %v237, %v198
    %vm247 = vcmask 64512
    %248 = vst.msk [vmem:[%s3] sm:$0xff] %vm247, %v239
    %249 = vst.msk [vmem:[%s3 + $0x8] sm:$0xff] %vm247, %v240
    %250 = vst.msk [vmem:[%s3 + $0x10] sm:$0xff] %vm247, %v241
    %251 = vst.msk [vmem:[%s3 + $0x18] sm:$0xff] %vm247, %v242
    %252 = vst.msk [vmem:[%s3 + $0x20] sm:$0xff] %vm247, %v243
    %253 = vst.msk [vmem:[%s3 + $0x28] sm:$0xff] %vm247, %v244
    %254 = vst.msk [vmem:[%s3 + $0x30] sm:$0xff] %vm247, %v245
    %255 = vst.msk [vmem:[%s3 + $0x38] sm:$0xff] %vm247, %v246
  $region17: #{tpu_custom_call.1} parent=0 // pred_fallthru
    _
  // Predicated region
  $region18: #{tpu_custom_call.1} parent=0 // pred_check
    _
  $region19: #{tpu_custom_call.1} parent=0 // pred_check_branch
    %257 = sbr.rel (0) target = $region21
  $region20: #{tpu_custom_call.1} parent=0 // pred_region
    _
  $region21: #{tpu_custom_call.1} parent=0 // pred_fallthru
    _
  // Predicated region
  $region22: #{tpu_custom_call.1} parent=0 // pred_check
    _
  $region23: #{tpu_custom_call.1} parent=0 // pred_check_branch
    %259 = sbr.rel (0) target = $region25
  $region24: #{tpu_custom_call.1} parent=0 // pred_region
    _
  $region25: #{tpu_custom_call.1} parent=0 // pred_fallthru
    _
  // Predicated region
  $region26: #{tpu_custom_call.1} parent=0 // pred_check
    _
  $region27: #{tpu_custom_call.1} parent=0 // pred_check_branch
    %261 = sbr.rel (0) target = $region29
  $region28: #{tpu_custom_call.1} parent=0 // pred_region
    _
  $region29: #{tpu_custom_call.1} parent=0 // pred_fallthru
    _
  // Predicated region
  $region30: #{tpu_custom_call.1} parent=0 // pred_check
    _
  $region31: #{tpu_custom_call.1} parent=0 // pred_check_branch
    %263 = sbr.rel (0) target = $region33
  $region32: #{tpu_custom_call.1} parent=0 // pred_region
    _
  $region33: #{tpu_custom_call.1} parent=0 // pred_fallthru
    _

</llo_original>
